<compile_context>
chip_gen: v7x
topology: tpu7x:2x2x1
jax: 0.10.0
libtpu: 0.0.40
codegen_flags: <defaults>
</compile_context>

<pallas_src>
import math
import jax
import jax.numpy as jnp
from jax.experimental import pallas as pl
from jax.experimental.pallas import tpu as pltpu


# ----------------------------- helpers ------------------------------------- #

def _round_up(x, m):
    return (x + m - 1) // m * m


def _pack_gate_cols(w_t, H, Hp):
    """(in_dim, 3H) -> (in_dim, 3*Hp): each gate's column block padded to Hp lanes."""
    blocks = []
    for g in range(3):
        blk = w_t[:, g * H:(g + 1) * H]
        blocks.append(jnp.pad(blk, ((0, 0), (0, Hp - H))))
    return jnp.concatenate(blocks, axis=-1)


def _pack_gate_vec(b, H, Hp):
    """(3H,) -> (3*Hp,): per-gate lane padding."""
    blocks = []
    for g in range(3):
        blocks.append(jnp.pad(b[g * H:(g + 1) * H], (0, Hp - H)))
    return jnp.concatenate(blocks, axis=-1)


def _merged_gi_bias(b_ih, b_hh, H):
    """Gate-preactivation bias: [b_ir + b_hr, b_iz + b_hz, b_in].
    b_hn must stay separate (it sits inside the r*(W_hn h + b_hn) term)."""
    return jnp.concatenate([
        b_ih[0:H] + b_hh[0:H],
        b_ih[H:2 * H] + b_hh[H:2 * H],
        b_ih[2 * H:3 * H],
    ])


# ----------------------------- Pallas kernel ------------------------------- #

def _make_encoder_gru_kernel(seq_len, Bp, Hp, n_layers):
    """Fused multi-layer GRU recurrence. Single invocation, no grid.

    gi0_ref : (S*Bp, 3Hp)  layer-0 gate pre-activations (input proj. hoisted to XLA)
    wih_ref : (max(L-1,1), Hp, 3Hp)  W_ih^T for layers >= 1 (padded, gate-aligned)
    whh_ref : (L, Hp, 3Hp)           W_hh^T per layer (padded, gate-aligned)
    bih_ref : (max(L-1,1), 1, 3Hp)   merged gi bias for layers >= 1
    bhn_ref : (L, 1, Hp)             b_hn per layer
    out_ref : (S*Bp, Hp)             top-layer outputs
    hn_ref  : (L, Bp, Hp)            final hidden per layer
    gi_scr  : (S*Bp, 3Hp) VMEM       gate pre-activations of the current layer
    seq_scr : (S*Bp, Hp)  VMEM       outputs of the current (non-top) layer
    """

    def kernel(gi0_ref, wih_ref, whh_ref, bih_ref, bhn_ref,
               out_ref, hn_ref, gi_scr, seq_scr):
        for l in range(n_layers):                      # static unroll over layers
            if l == 0:
                gi_src = gi0_ref
            else:
                # Full-sequence input projection for this layer: one big MXU matmul
                # on the VMEM-resident previous-layer output.
                gi_scr[...] = (
                    jnp.dot(seq_scr[...], wih_ref[l - 1],
                            preferred_element_type=jnp.float32)
                    + bih_ref[l - 1])
                gi_src = gi_scr

            dst = out_ref if l == n_layers - 1 else seq_scr

            def step(t, h, l=l, gi_src=gi_src, dst=dst):
                row = pl.multiple_of(t * Bp, Bp)
                gi = gi_src[pl.ds(row, Bp), :]                       # (Bp, 3Hp)
                gh = jnp.dot(h, whh_ref[l],
                             preferred_element_type=jnp.float32)     # (Bp, 3Hp)
                # lane-aligned gate slices (Hp is a multiple of 128)
                i_r = gi[:, 0:Hp]
                i_z = gi[:, Hp:2 * Hp]
                i_n = gi[:, 2 * Hp:3 * Hp]
                h_r = gh[:, 0:Hp]
                h_z = gh[:, Hp:2 * Hp]
                h_n = gh[:, 2 * Hp:3 * Hp] + bhn_ref[l]
                r = jax.nn.sigmoid(i_r + h_r)
                z = jax.nn.sigmoid(i_z + h_z)
                n = jnp.tanh(i_n + r * h_n)
                h_new = (1.0 - z) * n + z * h
                dst[pl.ds(row, Bp), :] = h_new
                return h_new

            h_last = jax.lax.fori_loop(
                0, seq_len, step, jnp.zeros((Bp, Hp), jnp.float32))
            hn_ref[l, :, :] = h_last                   # written once per layer

    return kernel


def encoder_gru_pallas(gi0, wih, whh, bih, bhn, *, seq_len, Bp, Hp, n_layers):
    G = 3 * Hp
    kernel = _make_encoder_gru_kernel(seq_len, Bp, Hp, n_layers)
    out2d, hn = pl.pallas_call(
        kernel,
        out_shape=(jax.ShapeDtypeStruct((seq_len * Bp, Hp), jnp.float32),
                   jax.ShapeDtypeStruct((n_layers, Bp, Hp), jnp.float32)),
        in_specs=[pl.BlockSpec(memory_space=pltpu.MemorySpace.VMEM)] * 5,
        out_specs=(pl.BlockSpec(memory_space=pltpu.MemorySpace.VMEM),
                   pl.BlockSpec(memory_space=pltpu.MemorySpace.VMEM)),
        scratch_shapes=[pltpu.VMEM((seq_len * Bp, G), jnp.float32),
                        pltpu.VMEM((seq_len * Bp, Hp), jnp.float32)],
    )(gi0, wih, whh, bih, bhn)
    return out2d, hn


# ----------------------------- Encoder forward ----------------------------- #

def init_encoder_params(key, input_dim, emb_dim, hid_dim, n_layers):
    """Deterministic init matching the shapes nn.Embedding / nn.GRU create."""
    keys = jax.random.split(key, 1 + 4 * n_layers)
    params = {"embedding": jax.random.normal(keys[0], (input_dim, emb_dim), jnp.float32)}
    k = 1.0 / math.sqrt(hid_dim)
    layers = []
    for l in range(n_layers):
        in_dim = emb_dim if l == 0 else hid_dim
        kk = keys[1 + 4 * l: 1 + 4 * (l + 1)]
        layers.append(dict(
            w_ih=jax.random.uniform(kk[0], (3 * hid_dim, in_dim), jnp.float32, -k, k),
            w_hh=jax.random.uniform(kk[1], (3 * hid_dim, hid_dim), jnp.float32, -k, k),
            b_ih=jax.random.uniform(kk[2], (3 * hid_dim,), jnp.float32, -k, k),
            b_hh=jax.random.uniform(kk[3], (3 * hid_dim,), jnp.float32, -k, k),
        ))
    params["gru"] = layers
    return params


def encoder_forward(params, src):
    """src: (S, B) int32.  Returns (output (S,B,H), hidden (n_layers,B,H))."""
    S, B = src.shape
    layers = params["gru"]
    n_layers = len(layers)
    H = layers[0]["w_hh"].shape[1]
    Bp = _round_up(B, 8)        # sublane padding
    Hp = _round_up(H, 128)      # lane padding per gate
    G = 3 * Hp

    # Plain-JAX glue: embedding gather (dropout = identity in eval mode).
    emb = jnp.take(params["embedding"], src, axis=0)              # (S, B, E)
    emb_p = jnp.pad(emb, ((0, 0), (0, Bp - B), (0, 0)))           # (S, Bp, E)
    x2d = emb_p.reshape(S * Bp, -1)

    # Layer-0 input projection hoisted out of the recurrence: one big matmul.
    l0 = layers[0]
    wih0_t = _pack_gate_cols(l0["w_ih"].T, H, Hp)                 # (E, 3Hp)
    b_gi0 = _pack_gate_vec(_merged_gi_bias(l0["b_ih"], l0["b_hh"], H), H, Hp)
    gi0 = jnp.dot(x2d, wih0_t, preferred_element_type=jnp.float32) + b_gi0[None, :]

    # Padded / lane-aligned weight stacks for the fused kernel.
    whh_list, bhn_list, wih_list, bih_list = [], [], [], []
    for l, layer in enumerate(layers):
        whh_t = _pack_gate_cols(layer["w_hh"].T, H, Hp)           # (H, 3Hp)
        whh_list.append(jnp.pad(whh_t, ((0, Hp - H), (0, 0))))    # (Hp, 3Hp)
        bhn_list.append(jnp.pad(layer["b_hh"][2 * H:3 * H], (0, Hp - H))[None, :])
        if l >= 1:
            wih_t = _pack_gate_cols(layer["w_ih"].T, H, Hp)
            wih_list.append(jnp.pad(wih_t, ((0, Hp - H), (0, 0))))
            b_gi = _pack_gate_vec(_merged_gi_bias(layer["b_ih"], layer["b_hh"], H), H, Hp)
            bih_list.append(b_gi[None, :])
    whh = jnp.stack(whh_list)                                     # (L, Hp, 3Hp)
    bhn = jnp.stack(bhn_list)                                     # (L, 1, Hp)
    if n_layers > 1:
        wih = jnp.stack(wih_list)                                 # (L-1, Hp, 3Hp)
        bih = jnp.stack(bih_list)                                 # (L-1, 1, 3Hp)
    else:
        wih = jnp.zeros((1, Hp, G), jnp.float32)                  # dummy, unused
        bih = jnp.zeros((1, 1, G), jnp.float32)

    out2d, hn = encoder_gru_pallas(gi0, wih, whh, bih, bhn,
                                   seq_len=S, Bp=Bp, Hp=Hp, n_layers=n_layers)
    output = out2d.reshape(S, Bp, Hp)[:, :B, :H]
    hidden = hn[:, :B, :H]
    return output, hidden


# ----------------------------- pure-JAX reference --------------------------- #

def encoder_forward_ref(params, src):
    emb = jnp.take(params["embedding"], src, axis=0)
    x = emb
    finals = []
    for layer in params["gru"]:
        w_ih, w_hh = layer["w_ih"], layer["w_hh"]
        b_ih, b_hh = layer["b_ih"], layer["b_hh"]
        H = w_hh.shape[1]

        def step(h, x_t, w_ih=w_ih, w_hh=w_hh, b_ih=b_ih, b_hh=b_hh, H=H):
            gi = x_t @ w_ih.T + b_ih
            gh = h @ w_hh.T + b_hh
            i_r, i_z, i_n = gi[:, :H], gi[:, H:2 * H], gi[:, 2 * H:]
            h_r, h_z, h_n = gh[:, :H], gh[:, H:2 * H], gh[:, 2 * H:]
            r = jax.nn.sigmoid(i_r + h_r)
            z = jax.nn.sigmoid(i_z + h_z)
            n = jnp.tanh(i_n + r * h_n)
            h_new = (1.0 - z) * n + z * h
            return h_new, h_new

        h0 = jnp.zeros((x.shape[1], H), jnp.float32)
        h_last, ys = jax.lax.scan(step, h0, x)
        finals.append(h_last)
        x = ys
    return x, jnp.stack(finals, axis=0)


# ----------------------------- main ----------------------------------------- #

if __name__ == "__main__":
    INPUT_DIM = 50    # vocab size
    EMB_DIM = 16
    HID_DIM = 32
    N_LAYERS = 2
    SEQ_LEN = 8
    BATCH = 2

    key = jax.random.PRNGKey(0)
    pkey, skey = jax.random.split(key)
    params = init_encoder_params(pkey, INPUT_DIM, EMB_DIM, HID_DIM, N_LAYERS)
    src = jax.random.randint(skey, (SEQ_LEN, BATCH), 0, INPUT_DIM, dtype=jnp.int32)

    output, hidden = jax.jit(encoder_forward)(params, src)
    jax.block_until_ready((output, hidden))

    assert output.shape == (SEQ_LEN, BATCH, HID_DIM)
    assert hidden.shape == (N_LAYERS, BATCH, HID_DIM)
    # top-layer output at the last step must equal hidden[-1]
    assert jnp.allclose(output[-1], hidden[-1], atol=1e-6)

    # correctness vs. pure-JAX GRU reference
    ref_out, ref_hid = encoder_forward_ref(params, src)
    assert jnp.allclose(output, ref_out, atol=2e-3, rtol=2e-3)
    assert jnp.allclose(hidden, ref_hid, atol=2e-3, rtol=2e-3)

    print("KERNEL_OK")
</pallas_src>

<mosaic_0001>
module attributes {stable_mosaic.version = 11 : i64} {
  func.func @kernel(%arg0: memref<64x384xf32, #tpu.memory_space<vmem>>, %arg1: memref<1x128x384xf32, #tpu.memory_space<vmem>>, %arg2: memref<2x128x384xf32, #tpu.memory_space<vmem>>, %arg3: memref<1x1x384xf32, #tpu.memory_space<vmem>>, %arg4: memref<2x1x128xf32, #tpu.memory_space<vmem>>, %arg5: memref<64x128xf32, #tpu.memory_space<vmem>>, %arg6: memref<2x8x128xf32, #tpu.memory_space<vmem>>, %arg7: memref<64x384xf32, #tpu.memory_space<vmem>>, %arg8: memref<64x128xf32, #tpu.memory_space<vmem>>) attributes {dimension_semantics = [], scalar_prefetch = 0 : i64, scratch_operands = 2 : i64, tpu.core_type = #tpu.core_type<tc>} {
    %cst = arith.constant 0.000000e+00 : f32
    %0 = vector.broadcast %cst : f32 to vector<8x128xf32>
    %c0_i32 = arith.constant 0 : i32
    %c8_i32 = arith.constant 8 : i32
    %1 = arith.addi %c0_i32, %c8_i32 : i32
    %c1_i32 = arith.constant 1 : i32
    %2 = scf.for %arg9 = %c0_i32 to %1 step %c1_i32 iter_args(%arg10 = %0) -> (vector<8x128xf32>)  : i32 {
      %c8_i32_21 = arith.constant 8 : i32
      %21 = arith.muli %arg9, %c8_i32_21 : i32
      %22 = tpu.assume_multiple %21, 8 : i32
      %23 = arith.index_cast %22 : i32 to index
      %c0_22 = arith.constant 0 : index
      %24 = vector.load %arg0[%23, %c0_22] : memref<64x384xf32, #tpu.memory_space<vmem>>, vector<8x384xf32>
      %c0_23 = arith.constant 0 : index
      %c0_24 = arith.constant 0 : index
      %c0_25 = arith.constant 0 : index
      %25 = vector.load %arg2[%c0_23, %c0_24, %c0_25] : memref<2x128x384xf32, #tpu.memory_space<vmem>>, vector<1x128x384xf32>
      %26 = vector.shape_cast %25 : vector<1x128x384xf32> to vector<128x384xf32>
      %cst_26 = arith.constant dense<0.000000e+00> : vector<8x384xf32>
      %27 = tpu.matmul %arg10, %26, %cst_26 {dimension_numbers = #tpu.dot_dimension_numbers<[1], [0], [0], [1], [0, 0, 1, 1], [], []>} : vector<8x128xf32>, vector<128x384xf32>, vector<8x384xf32> -> vector<8x384xf32>
      %28 = vector.extract_strided_slice %24 {offsets = [0, 0], sizes = [8, 128], strides = [1, 1]} : vector<8x384xf32> to vector<8x128xf32>
      %29 = vector.extract_strided_slice %24 {offsets = [0, 128], sizes = [8, 128], strides = [1, 1]} : vector<8x384xf32> to vector<8x128xf32>
      %30 = vector.extract_strided_slice %24 {offsets = [0, 256], sizes = [8, 128], strides = [1, 1]} : vector<8x384xf32> to vector<8x128xf32>
      %31 = vector.extract_strided_slice %27 {offsets = [0, 0], sizes = [8, 128], strides = [1, 1]} : vector<8x384xf32> to vector<8x128xf32>
      %32 = vector.extract_strided_slice %27 {offsets = [0, 128], sizes = [8, 128], strides = [1, 1]} : vector<8x384xf32> to vector<8x128xf32>
      %33 = vector.extract_strided_slice %27 {offsets = [0, 256], sizes = [8, 128], strides = [1, 1]} : vector<8x384xf32> to vector<8x128xf32>
      %c0_27 = arith.constant 0 : index
      %c0_28 = arith.constant 0 : index
      %c0_29 = arith.constant 0 : index
      %34 = vector.load %arg4[%c0_27, %c0_28, %c0_29] : memref<2x1x128xf32, #tpu.memory_space<vmem>>, vector<1x1x128xf32>
      %35 = vector.shape_cast %34 : vector<1x1x128xf32> to vector<1x128xf32>
      %36 = vector.broadcast %35 : vector<1x128xf32> to vector<8x128xf32>
      %37 = arith.addf %33, %36 : vector<8x128xf32>
      %38 = arith.addf %28, %31 : vector<8x128xf32>
      %39 = arith.negf %38 : vector<8x128xf32>
      %40 = math.exp %39 : vector<8x128xf32>
      %cst_30 = arith.constant 1.000000e+00 : f32
      %41 = vector.broadcast %cst_30 : f32 to vector<8x128xf32>
      %42 = arith.addf %41, %40 : vector<8x128xf32>
      %43 = arith.divf %41, %42 : vector<8x128xf32>
      %44 = arith.addf %29, %32 : vector<8x128xf32>
      %45 = arith.negf %44 : vector<8x128xf32>
      %46 = math.exp %45 : vector<8x128xf32>
      %cst_31 = arith.constant 1.000000e+00 : f32
      %47 = vector.broadcast %cst_31 : f32 to vector<8x128xf32>
      %48 = arith.addf %47, %46 : vector<8x128xf32>
      %49 = arith.divf %47, %48 : vector<8x128xf32>
      %50 = arith.mulf %43, %37 : vector<8x128xf32>
      %51 = arith.addf %30, %50 : vector<8x128xf32>
      %52 = math.tanh %51 : vector<8x128xf32>
      %cst_32 = arith.constant 1.000000e+00 : f32
      %53 = vector.broadcast %cst_32 : f32 to vector<8x128xf32>
      %54 = arith.subf %53, %49 : vector<8x128xf32>
      %55 = arith.mulf %54, %52 : vector<8x128xf32>
      %56 = arith.mulf %49, %arg10 : vector<8x128xf32>
      %57 = arith.addf %55, %56 : vector<8x128xf32>
      %58 = arith.index_cast %22 : i32 to index
      %c0_33 = arith.constant 0 : index
      %59 = vector.load %arg8[%58, %c0_33] : memref<64x128xf32, #tpu.memory_space<vmem>>, vector<8x128xf32>
      tpu.vector_store %arg8[%58, %c0_33], %57 {strides = array<i32>} : memref<64x128xf32, #tpu.memory_space<vmem>>, vector<8x128xf32>,
      scf.yield %57 : vector<8x128xf32>
    }
    %c8_i32_0 = arith.constant 8 : i32
    %c0 = arith.constant 0 : index
    %c0_1 = arith.constant 0 : index
    %c0_2 = arith.constant 0 : index
    %3 = vector.load %arg6[%c0, %c0_1, %c0_2] : memref<2x8x128xf32, #tpu.memory_space<vmem>>, vector<1x8x128xf32>
    %4 = vector.shape_cast %3 : vector<1x8x128xf32> to vector<8x128xf32>
    %5 = vector.shape_cast %2 : vector<8x128xf32> to vector<1x8x128xf32>
    tpu.vector_store %arg6[%c0, %c0_1, %c0_2], %5 {strides = array<i32>} : memref<2x8x128xf32, #tpu.memory_space<vmem>>, vector<1x8x128xf32>,
    %c0_3 = arith.constant 0 : index
    %c0_4 = arith.constant 0 : index
    %6 = vector.load %arg8[%c0_3, %c0_4] : memref<64x128xf32, #tpu.memory_space<vmem>>, vector<64x128xf32>
    %c0_5 = arith.constant 0 : index
    %c0_6 = arith.constant 0 : index
    %c0_7 = arith.constant 0 : index
    %7 = vector.load %arg1[%c0_5, %c0_6, %c0_7] : memref<1x128x384xf32, #tpu.memory_space<vmem>>, vector<1x128x384xf32>
    %8 = vector.shape_cast %7 : vector<1x128x384xf32> to vector<128x384xf32>
    %cst_8 = arith.constant dense<0.000000e+00> : vector<64x384xf32>
    %9 = tpu.matmul %6, %8, %cst_8 {dimension_numbers = #tpu.dot_dimension_numbers<[1], [0], [0], [1], [0, 0, 1, 1], [], []>} : vector<64x128xf32>, vector<128x384xf32>, vector<64x384xf32> -> vector<64x384xf32>
    %c0_9 = arith.constant 0 : index
    %c0_10 = arith.constant 0 : index
    %c0_11 = arith.constant 0 : index
    %10 = vector.load %arg3[%c0_9, %c0_10, %c0_11] : memref<1x1x384xf32, #tpu.memory_space<vmem>>, vector<1x1x384xf32>
    %11 = vector.shape_cast %10 : vector<1x1x384xf32> to vector<1x384xf32>
    %12 = vector.broadcast %11 : vector<1x384xf32> to vector<64x384xf32>
    %13 = arith.addf %9, %12 : vector<64x384xf32>
    %c0_12 = arith.constant 0 : index
    %c0_13 = arith.constant 0 : index
    %14 = vector.load %arg7[%c0_12, %c0_13] : memref<64x384xf32, #tpu.memory_space<vmem>>, vector<64x384xf32>
    tpu.vector_store %arg7[%c0_12, %c0_13], %13 {strides = array<i32>} : memref<64x384xf32, #tpu.memory_space<vmem>>, vector<64x384xf32>,
    %cst_14 = arith.constant 0.000000e+00 : f32
    %15 = vector.broadcast %cst_14 : f32 to vector<8x128xf32>
    %c0_i32_15 = arith.constant 0 : i32
    %c8_i32_16 = arith.constant 8 : i32
    %16 = arith.addi %c0_i32_15, %c8_i32_16 : i32
    %c1_i32_17 = arith.constant 1 : i32
    %17 = scf.for %arg9 = %c0_i32_15 to %16 step %c1_i32_17 iter_args(%arg10 = %15) -> (vector<8x128xf32>)  : i32 {
      %c8_i32_21 = arith.constant 8 : i32
      %21 = arith.muli %arg9, %c8_i32_21 : i32
      %22 = tpu.assume_multiple %21, 8 : i32
      %23 = arith.index_cast %22 : i32 to index
      %c0_22 = arith.constant 0 : index
      %24 = vector.load %arg7[%23, %c0_22] : memref<64x384xf32, #tpu.memory_space<vmem>>, vector<8x384xf32>
      %c1_23 = arith.constant 1 : index
      %c0_24 = arith.constant 0 : index
      %c0_25 = arith.constant 0 : index
      %25 = vector.load %arg2[%c1_23, %c0_24, %c0_25] : memref<2x128x384xf32, #tpu.memory_space<vmem>>, vector<1x128x384xf32>
      %26 = vector.shape_cast %25 : vector<1x128x384xf32> to vector<128x384xf32>
      %cst_26 = arith.constant dense<0.000000e+00> : vector<8x384xf32>
      %27 = tpu.matmul %arg10, %26, %cst_26 {dimension_numbers = #tpu.dot_dimension_numbers<[1], [0], [0], [1], [0, 0, 1, 1], [], []>} : vector<8x128xf32>, vector<128x384xf32>, vector<8x384xf32> -> vector<8x384xf32>
      %28 = vector.extract_strided_slice %24 {offsets = [0, 0], sizes = [8, 128], strides = [1, 1]} : vector<8x384xf32> to vector<8x128xf32>
      %29 = vector.extract_strided_slice %24 {offsets = [0, 128], sizes = [8, 128], strides = [1, 1]} : vector<8x384xf32> to vector<8x128xf32>
      %30 = vector.extract_strided_slice %24 {offsets = [0, 256], sizes = [8, 128], strides = [1, 1]} : vector<8x384xf32> to vector<8x128xf32>
      %31 = vector.extract_strided_slice %27 {offsets = [0, 0], sizes = [8, 128], strides = [1, 1]} : vector<8x384xf32> to vector<8x128xf32>
      %32 = vector.extract_strided_slice %27 {offsets = [0, 128], sizes = [8, 128], strides = [1, 1]} : vector<8x384xf32> to vector<8x128xf32>
      %33 = vector.extract_strided_slice %27 {offsets = [0, 256], sizes = [8, 128], strides = [1, 1]} : vector<8x384xf32> to vector<8x128xf32>
      %c1_27 = arith.constant 1 : index
      %c0_28 = arith.constant 0 : index
      %c0_29 = arith.constant 0 : index
      %34 = vector.load %arg4[%c1_27, %c0_28, %c0_29] : memref<2x1x128xf32, #tpu.memory_space<vmem>>, vector<1x1x128xf32>
      %35 = vector.shape_cast %34 : vector<1x1x128xf32> to vector<1x128xf32>
      %36 = vector.broadcast %35 : vector<1x128xf32> to vector<8x128xf32>
      %37 = arith.addf %33, %36 : vector<8x128xf32>
      %38 = arith.addf %28, %31 : vector<8x128xf32>
      %39 = arith.negf %38 : vector<8x128xf32>
      %40 = math.exp %39 : vector<8x128xf32>
      %cst_30 = arith.constant 1.000000e+00 : f32
      %41 = vector.broadcast %cst_30 : f32 to vector<8x128xf32>
      %42 = arith.addf %41, %40 : vector<8x128xf32>
      %43 = arith.divf %41, %42 : vector<8x128xf32>
      %44 = arith.addf %29, %32 : vector<8x128xf32>
      %45 = arith.negf %44 : vector<8x128xf32>
      %46 = math.exp %45 : vector<8x128xf32>
      %cst_31 = arith.constant 1.000000e+00 : f32
      %47 = vector.broadcast %cst_31 : f32 to vector<8x128xf32>
      %48 = arith.addf %47, %46 : vector<8x128xf32>
      %49 = arith.divf %47, %48 : vector<8x128xf32>
      %50 = arith.mulf %43, %37 : vector<8x128xf32>
      %51 = arith.addf %30, %50 : vector<8x128xf32>
      %52 = math.tanh %51 : vector<8x128xf32>
      %cst_32 = arith.constant 1.000000e+00 : f32
      %53 = vector.broadcast %cst_32 : f32 to vector<8x128xf32>
      %54 = arith.subf %53, %49 : vector<8x128xf32>
      %55 = arith.mulf %54, %52 : vector<8x128xf32>
      %56 = arith.mulf %49, %arg10 : vector<8x128xf32>
      %57 = arith.addf %55, %56 : vector<8x128xf32>
      %58 = arith.index_cast %22 : i32 to index
      %c0_33 = arith.constant 0 : index
      %59 = vector.load %arg5[%58, %c0_33] : memref<64x128xf32, #tpu.memory_space<vmem>>, vector<8x128xf32>
      tpu.vector_store %arg5[%58, %c0_33], %57 {strides = array<i32>} : memref<64x128xf32, #tpu.memory_space<vmem>>, vector<8x128xf32>,
      scf.yield %57 : vector<8x128xf32>
    }
    %c8_i32_18 = arith.constant 8 : i32
    %c1 = arith.constant 1 : index
    %c0_19 = arith.constant 0 : index
    %c0_20 = arith.constant 0 : index
    %18 = vector.load %arg6[%c1, %c0_19, %c0_20] : memref<2x8x128xf32, #tpu.memory_space<vmem>>, vector<1x8x128xf32>
    %19 = vector.shape_cast %18 : vector<1x8x128xf32> to vector<8x128xf32>
    %20 = vector.shape_cast %17 : vector<8x128xf32> to vector<1x8x128xf32>
    tpu.vector_store %arg6[%c1, %c0_19, %c0_20], %20 {strides = array<i32>} : memref<2x8x128xf32, #tpu.memory_space<vmem>>, vector<1x8x128xf32>,
    return
  }
}

</mosaic_0001>

<llo_original>
// kernel: encoder_forward.1
$region0: #{encoder_forward.1}
  #allocation0 [shape = 'u32[]', space=smem, size = 0x4, offset = 0x4, fixed_abs, tag = 'smem constant byte address 0x4 - core index']
  #allocation1 [shape = 'u32[144,128]{1,0:T(1,128)}', space=vmem, size = 0x12000, scoped, tag = 'internal scratch']
  #allocation2 [shape = 'f32[64,384]{1,0:T(8,128)}', space=vmem, size = 0x18000, scoped, tag = 'scratch operand']
  #allocation3 [shape = 'f32[64,128]{1,0:T(8,128)}', space=vmem, size = 0x8000, scoped, tag = 'scratch operand']
  %s0 = inlined_call_operand.vmem [shape: f32[64,384], index: 0, kind: input, shape index: {}]
  %s1 = inlined_call_operand.vmem [shape: f32[1,128,384], index: 1, kind: input, shape index: {}]
  %s2 = inlined_call_operand.vmem [shape: f32[2,128,384], index: 2, kind: input, shape index: {}]
  %s3 = inlined_call_operand.vmem [shape: f32[1,1,384], index: 3, kind: input, shape index: {}]
  %s4 = inlined_call_operand.vmem [shape: f32[2,1,128], index: 4, kind: input, shape index: {}]
  %s5 = inlined_call_operand.vmem [shape: f32[64,128], index: 5, kind: output, shape index: {0}]
  %s6 = inlined_call_operand.vmem [shape: f32[2,8,128], index: 6, kind: output, shape index: {1}]
  %7 = xla_tuple %s5, %s6
  %s8 = sld [smem:[#allocation0]]
  $region52: #{encoder_forward.1} parent=0
    _
  %s10 = ssub.s32 1, %s8
  %s11 = scalar_select 0, %s10, %s8
  // Predicated region
  $region2: #{encoder_forward.1} parent=0 // pred_check
    _
  $region3: #{encoder_forward.1} parent=0 // pred_check_branch
    %13 = sbr.rel (0) target = $region5
  $region4: #{encoder_forward.1} parent=0 // pred_region
    _
  $region5: #{encoder_forward.1} parent=0 // pred_fallthru
    _
  // Predicated region
  $region6: #{encoder_forward.1} parent=0 // pred_check
    _
  $region7: #{encoder_forward.1} parent=0 // pred_check_branch
    %15 = sbr.rel (0) target = $region9
  $region8: #{encoder_forward.1} parent=0 // pred_region
    _
  $region9: #{encoder_forward.1} parent=0 // pred_fallthru
    _
  // Predicated region
  $region10: #{encoder_forward.1} parent=0 // pred_check
    _
  $region11: #{encoder_forward.1} parent=0 // pred_check_branch
    %17 = sbr.rel (0) target = $region13
  $region12: #{encoder_forward.1} parent=0 // pred_region
    _
  $region13: #{encoder_forward.1} parent=0 // pred_fallthru
    _
  // Predicated region
  $region14: #{encoder_forward.1} parent=0 // pred_check
    _
  $region15: #{encoder_forward.1} parent=0 // pred_check_branch
    %19 = sbr.rel (0) target = $region17
  $region16: #{encoder_forward.1} parent=0 // pred_region
    _
  $region17: #{encoder_forward.1} parent=0 // pred_fallthru
    _
  // Predicated region
  $region18: #{encoder_forward.1} parent=0 // pred_check
    _
  $region19: #{encoder_forward.1} parent=0 // pred_check_branch
    %21 = sbr.rel (0) target = $region21
  $region20: #{encoder_forward.1} parent=0 // pred_region
    _
  $region21: #{encoder_forward.1} parent=0 // pred_fallthru
    _
  loop: start=0, step=1, limit=8
  $region22: #{encoder_forward.1} parent=0 // loop_pre_header
    _
  $region23: #{encoder_forward.1} parent=0 // loop_header
    %s23 = sphi 0, %s27
    %p24 = scmp.ge.s32.totalorder %s23, 8
    %v28 = vphi 0.0, %v255
  $region24: #{encoder_forward.1} parent=0 // loop_header_branch
    %26 = sbr.rel (%p24) target = $region28
  $region25: #{encoder_forward.1} parent=0 // loop_body
    %s29 = smul.u32 %s23, 8
    %s30 = sshra.s32 %s29, 3
    %s31 = sand.u32 %s29, 7
    %s32 = smul.u32 %s30, 3
    %s33 = smul.addr %s32, 8
    %s34 = scalar_lea.vmem %s0, %s33
    %v35 = vld [vmem:[%s34] sm:$0xff]
    %v36 = vld [vmem:[%s34 + $0x8] sm:$0xff]
    %v37 = vld [vmem:[%s34 + $0x10] sm:$0xff]
    %v38 = vld [vmem:[%s2] sm:$0xff]
    %v39 = vld [vmem:[%s2 + $0x8] sm:$0xff]
    %v40 = vld [vmem:[%s2 + $0x10] sm:$0xff]
    %v41 = vld [vmem:[%s2 + $0x18] sm:$0xff]
    %v42 = vld [vmem:[%s2 + $0x20] sm:$0xff]
    %v43 = vld [vmem:[%s2 + $0x28] sm:$0xff]
    %v44 = vld [vmem:[%s2 + $0x30] sm:$0xff]
    %v45 = vld [vmem:[%s2 + $0x38] sm:$0xff]
    %v46 = vld [vmem:[%s2 + $0x40] sm:$0xff]
    %v47 = vld [vmem:[%s2 + $0x48] sm:$0xff]
    %v48 = vld [vmem:[%s2 + $0x50] sm:$0xff]
    %v49 = vld [vmem:[%s2 + $0x58] sm:$0xff]
    %v50 = vld [vmem:[%s2 + $0x60] sm:$0xff]
    %v51 = vld [vmem:[%s2 + $0x68] sm:$0xff]
    %v52 = vld [vmem:[%s2 + $0x70] sm:$0xff]
    %v53 = vld [vmem:[%s2 + $0x78] sm:$0xff]
    %v54 = vld [vmem:[%s2 + $0x80] sm:$0xff]
    %v55 = vld [vmem:[%s2 + $0x88] sm:$0xff]
    %v56 = vld [vmem:[%s2 + $0x90] sm:$0xff]
    %v57 = vld [vmem:[%s2 + $0x98] sm:$0xff]
    %v58 = vld [vmem:[%s2 + $0xa0] sm:$0xff]
    %v59 = vld [vmem:[%s2 + $0xa8] sm:$0xff]
    %v60 = vld [vmem:[%s2 + $0xb0] sm:$0xff]
    %v61 = vld [vmem:[%s2 + $0xb8] sm:$0xff]
    %v62 = vld [vmem:[%s2 + $0xc0] sm:$0xff]
    %v63 = vld [vmem:[%s2 + $0xc8] sm:$0xff]
    %v64 = vld [vmem:[%s2 + $0xd0] sm:$0xff]
    %v65 = vld [vmem:[%s2 + $0xd8] sm:$0xff]
    %v66 = vld [vmem:[%s2 + $0xe0] sm:$0xff]
    %v67 = vld [vmem:[%s2 + $0xe8] sm:$0xff]
    %v68 = vld [vmem:[%s2 + $0xf0] sm:$0xff]
    %v69 = vld [vmem:[%s2 + $0xf8] sm:$0xff]
    %v70 = vld [vmem:[%s2 + $0x100] sm:$0xff]
    %v71 = vld [vmem:[%s2 + $0x108] sm:$0xff]
    %v72 = vld [vmem:[%s2 + $0x110] sm:$0xff]
    %v73 = vld [vmem:[%s2 + $0x118] sm:$0xff]
    %v74 = vld [vmem:[%s2 + $0x120] sm:$0xff]
    %v75 = vld [vmem:[%s2 + $0x128] sm:$0xff]
    %v76 = vld [vmem:[%s2 + $0x130] sm:$0xff]
    %v77 = vld [vmem:[%s2 + $0x138] sm:$0xff]
    %v78 = vld [vmem:[%s2 + $0x140] sm:$0xff]
    %v79 = vld [vmem:[%s2 + $0x148] sm:$0xff]
    %v80 = vld [vmem:[%s2 + $0x150] sm:$0xff]
    %v81 = vld [vmem:[%s2 + $0x158] sm:$0xff]
    %v82 = vld [vmem:[%s2 + $0x160] sm:$0xff]
    %v83 = vld [vmem:[%s2 + $0x168] sm:$0xff]
    %v84 = vld [vmem:[%s2 + $0x170] sm:$0xff]
    %v85 = vld [vmem:[%s2 + $0x178] sm:$0xff]
    %86 = vmatprep.subr.mxu0 %v39
    %87 = vmatpush1.msra.mxu0 %v38
    %88 = vmatprep.subr.mxu0 %v42
    %89 = vmatpush1.msra.mxu0 %v41
    %90 = vmatprep.subr.mxu0 %v45
    %91 = vmatpush1.msra.mxu0 %v44
    %92 = vmatprep.subr.mxu0 %v48
    %93 = vmatpush1.msra.mxu0 %v47
    %94 = vmatprep.subr.mxu0 %v51
    %95 = vmatpush1.msra.mxu0 %v50
    %96 = vmatprep.subr.mxu0 %v54
    %97 = vmatpush1.msra.mxu0 %v53
    %98 = vmatprep.subr.mxu0 %v57
    %99 = vmatpush1.msra.mxu0 %v56
    %100 = vmatprep.subr.mxu0 %v60
    %101 = vmatpush1.msra.mxu0 %v59
    %102 = vmatprep.subr.mxu0 %v63
    %103 = vmatpush1.msra.mxu0 %v62
    %104 = vmatprep.subr.mxu0 %v66
    %105 = vmatpush1.msra.mxu0 %v65
    %106 = vmatprep.subr.mxu0 %v69
    %107 = vmatpush1.msra.mxu0 %v68
    %108 = vmatprep.subr.mxu0 %v72
    %109 = vmatpush1.msra.mxu0 %v71
    %110 = vmatprep.subr.mxu0 %v75
    %111 = vmatpush1.msra.mxu0 %v74
    %112 = vmatprep.subr.mxu0 %v78
    %113 = vmatpush1.msra.mxu0 %v77
    %114 = vmatprep.subr.mxu0 %v81
    %115 = vmatpush1.msra.mxu0 %v80
    %116 = vmatprep.subr.mxu0 %v84
    %117 = vmatpush1.msra.mxu0 %v83
    %118 = vmatprep.subr.mxu0 0.0
    %119 = vmatpush1.msra.mxu0 0.0
    %120 = vmatprep.subr.mxu0 0.0
    %121 = vmatpush1.msra.mxu0 0.0
    %122 = vmatprep.subr.mxu0 0.0
    %123 = vmatpush1.msra.mxu0 0.0
    %124 = vmatprep.subr.mxu0 0.0
    %125 = vmatpush1.msra.mxu0 0.0
    %126 = vmatprep.subr.mxu0 0.0
    %127 = vmatpush1.msra.mxu0 0.0
    %128 = vmatprep.subr.mxu0 0.0
    %129 = vmatpush1.msra.mxu0 0.0
    %130 = vmatprep.subr.mxu0 0.0
    %131 = vmatpush1.msra.mxu0 0.0
    %132 = vmatprep.subr.mxu0 0.0
    %133 = vmatpush1.msra.mxu0 0.0
    %134 = vmatprep.subr.mxu0 0.0
    %135 = vmatpush1.msra.mxu0 0.0
    %136 = vmatprep.subr.mxu0 0.0
    %137 = vmatpush1.msra.mxu0 0.0
    %138 = vmatprep.subr.mxu0 0.0
    %139 = vmatpush1.msra.mxu0 0.0
    %140 = vmatprep.subr.mxu0 0.0
    %141 = vmatpush1.msra.mxu0 0.0
    %142 = vmatprep.subr.mxu0 0.0
    %143 = vmatpush1.msra.mxu0 0.0
    %144 = vmatprep.subr.mxu0 0.0
    %145 = vmatpush1.msra.mxu0 0.0
    %146 = vmatprep.subr.mxu0 0.0
    %147 = vmatpush1.msra.mxu0 0.0
    %148 = vmatprep.subr.mxu0 0.0
    %149 = vmatpush1.msra.mxu0 0.0
    %150 = vmatprep.mubr.f32.mxu0 0.0
    %151 = vmatmul.mubr.f32.gmra.mrb[0].mxu0 %v28
    %v152 = vpop.f32.mrb[0].mxu0
    %v153 = vadd.f32 0.0, %v152
    %v154 = vpop.f32.mrb[0].mxu0
    %v155 = vadd.f32 0.0, %v154
    %156 = vdwg.mxu0
    %157 = vmatprep.subr.mxu0 0.0
    %158 = vmatpush1.msra.mxu0 %v40
    %159 = vmatprep.subr.mxu0 0.0
    %160 = vmatpush1.msra.mxu0 %v43
    %161 = vmatprep.subr.mxu0 0.0
    %162 = vmatpush1.msra.mxu0 %v46
    %163 = vmatprep.subr.mxu0 0.0
    %164 = vmatpush1.msra.mxu0 %v49
    %165 = vmatprep.subr.mxu0 0.0
    %166 = vmatpush1.msra.mxu0 %v52
    %167 = vmatprep.subr.mxu0 0.0
    %168 = vmatpush1.msra.mxu0 %v55
    %169 = vmatprep.subr.mxu0 0.0
    %170 = vmatpush1.msra.mxu0 %v58
    %171 = vmatprep.subr.mxu0 0.0
    %172 = vmatpush1.msra.mxu0 %v61
    %173 = vmatprep.subr.mxu0 0.0
    %174 = vmatpush1.msra.mxu0 %v64
    %175 = vmatprep.subr.mxu0 0.0
    %176 = vmatpush1.msra.mxu0 %v67
    %177 = vmatprep.subr.mxu0 0.0
    %178 = vmatpush1.msra.mxu0 %v70
    %179 = vmatprep.subr.mxu0 0.0
    %180 = vmatpush1.msra.mxu0 %v73
    %181 = vmatprep.subr.mxu0 0.0
    %182 = vmatpush1.msra.mxu0 %v76
    %183 = vmatprep.subr.mxu0 0.0
    %184 = vmatpush1.msra.mxu0 %v79
    %185 = vmatprep.subr.mxu0 0.0
    %186 = vmatpush1.msra.mxu0 %v82
    %187 = vmatprep.subr.mxu0 0.0
    %188 = vmatpush1.msra.mxu0 %v85
    %189 = vmatprep.subr.mxu0 0.0
    %190 = vmatpush1.msra.mxu0 0.0
    %191 = vmatprep.subr.mxu0 0.0
    %192 = vmatpush1.msra.mxu0 0.0
    %193 = vmatprep.subr.mxu0 0.0
    %194 = vmatpush1.msra.mxu0 0.0
    %195 = vmatprep.subr.mxu0 0.0
    %196 = vmatpush1.msra.mxu0 0.0
    %197 = vmatprep.subr.mxu0 0.0
    %198 = vmatpush1.msra.mxu0 0.0
    %199 = vmatprep.subr.mxu0 0.0
    %200 = vmatpush1.msra.mxu0 0.0
    %201 = vmatprep.subr.mxu0 0.0
    %202 = vmatpush1.msra.mxu0 0.0
    %203 = vmatprep.subr.mxu0 0.0
    %204 = vmatpush1.msra.mxu0 0.0
    %205 = vmatprep.subr.mxu0 0.0
    %206 = vmatpush1.msra.mxu0 0.0
    %207 = vmatprep.subr.mxu0 0.0
    %208 = vmatpush1.msra.mxu0 0.0
    %209 = vmatprep.subr.mxu0 0.0
    %210 = vmatpush1.msra.mxu0 0.0
    %211 = vmatprep.subr.mxu0 0.0
    %212 = vmatpush1.msra.mxu0 0.0
    %213 = vmatprep.subr.mxu0 0.0
    %214 = vmatpush1.msra.mxu0 0.0
    %215 = vmatprep.subr.mxu0 0.0
    %216 = vmatpush1.msra.mxu0 0.0
    %217 = vmatprep.subr.mxu0 0.0
    %218 = vmatpush1.msra.mxu0 0.0
    %219 = vmatprep.subr.mxu0 0.0
    %220 = vmatpush1.msra.mxu0 0.0
    %221 = vmatprep.mubr.f32.mxu0 0.0
    %222 = vmatmul.mubr.f32.gmra.mrb[0].mxu0 %v28
    %v223 = vpop.f32.mrb[0].mxu0
    %v224 = vadd.f32 0.0, %v223
    %v225 = vpop.f32.mrb[0].mxu0
    %226 = vdwg.mxu0
    %v227 = vld [vmem:[%s4] sm:$0x1]
    %v229 = vlaneseq
    %v230 = vshrl.u32 %v229, 7
    %v231 = vsub.s32 0, %v230
    %v232 = vrot.slane %v227, %v231
    %v234 = vadd.f32 %v224, %v232
    %v235 = vadd.f32 %v35, %v153
    %v236 = vxor.u32 %v235, 2147483648
    %v237 = vmul.f32 %v236, 1.442695
    %v238 = vpow.pop %v237
    %v239 = vadd.f32 %v238, 1.0
    %v240 = vrcp.pop %v239
    %v241 = vmul.f32 1.0, %v240
    %v242 = vadd.f32 %v36, %v155
    %v243 = vxor.u32 %v242, 2147483648
    %v244 = vmul.f32 %v243, 1.442695
    %v245 = vpow.pop %v244
    %v246 = vadd.f32 %v245, 1.0
    %v247 = vrcp.pop %v246
    %v248 = vmul.f32 1.0, %v247
    %v249 = vmul.f32 %v241, %v234
    %v250 = vadd.f32 %v37, %v249
    %v251 = vtanh.pop %v250
    %v252 = vsub.f32 1.0, %v248
    %v253 = vmul.f32 %v252, %v251
    %v254 = vmul.f32 %v248, %v28
    %v255 = vadd.f32 %v253, %v254
    %s256 = scalar_lea.vmem [#allocation3], %s29
    %257 = vst [vmem:[%s256] sm:$0xff] %v255
  $region26: #{encoder_forward.1} parent=0 // loop_footer
    %s27 = sadd.s32 1, %s23
  $region27: #{encoder_forward.1} parent=0 // loop_footer_branch
    %22 = sbr.rel target = $region23
  $region28: #{encoder_forward.1} parent=0 // loop_exit
    _
  %258 = vst [vmem:[%s6] sm:$0xff] %v28
  %v259 = vld [vmem:[#allocation3] sm:$0xff]
  %v260 = vld [vmem:[#allocation3 + $0x8] sm:$0xff]
  %v261 = vld [vmem:[#allocation3 + $0x10] sm:$0xff]
  %v262 = vld [vmem:[#allocation3 + $0x18] sm:$0xff]
  %v263 = vld [vmem:[#allocation3 + $0x20] sm:$0xff]
  %v264 = vld [vmem:[#allocation3 + $0x28] sm:$0xff]
  %v265 = vld [vmem:[#allocation3 + $0x30] sm:$0xff]
  %v266 = vld [vmem:[#allocation3 + $0x38] sm:$0xff]
  %v267 = vld [vmem:[%s1] sm:$0xff]
  %v268 = vld [vmem:[%s1 + $0x8] sm:$0xff]
  %v269 = vld [vmem:[%s1 + $0x10] sm:$0xff]
  %v270 = vld [vmem:[%s1 + $0x18] sm:$0xff]
  %v271 = vld [vmem:[%s1 + $0x20] sm:$0xff]
  %v272 = vld [vmem:[%s1 + $0x28] sm:$0xff]
  %v273 = vld [vmem:[%s1 + $0x30] sm:$0xff]
  %v274 = vld [vmem:[%s1 + $0x38] sm:$0xff]
  %v275 = vld [vmem:[%s1 + $0x40] sm:$0xff]
  %v276 = vld [vmem:[%s1 + $0x48] sm:$0xff]
  %v277 = vld [vmem:[%s1 + $0x50] sm:$0xff]
  %v278 = vld [vmem:[%s1 + $0x58] sm:$0xff]
  %v279 = vld [vmem:[%s1 + $0x60] sm:$0xff]
  %v280 = vld [vmem:[%s1 + $0x68] sm:$0xff]
  %v281 = vld [vmem:[%s1 + $0x70] sm:$0xff]
  %v282 = vld [vmem:[%s1 + $0x78] sm:$0xff]
  %v283 = vld [vmem:[%s1 + $0x80] sm:$0xff]
  %v284 = vld [vmem:[%s1 + $0x88] sm:$0xff]
  %v285 = vld [vmem:[%s1 + $0x90] sm:$0xff]
  %v286 = vld [vmem:[%s1 + $0x98] sm:$0xff]
  %v287 = vld [vmem:[%s1 + $0xa0] sm:$0xff]
  %v288 = vld [vmem:[%s1 + $0xa8] sm:$0xff]
  %v289 = vld [vmem:[%s1 + $0xb0] sm:$0xff]
  %v290 = vld [vmem:[%s1 + $0xb8] sm:$0xff]
  %v291 = vld [vmem:[%s1 + $0xc0] sm:$0xff]
  %v292 = vld [vmem:[%s1 + $0xc8] sm:$0xff]
  %v293 = vld [vmem:[%s1 + $0xd0] sm:$0xff]
  %v294 = vld [vmem:[%s1 + $0xd8] sm:$0xff]
  %v295 = vld [vmem:[%s1 + $0xe0] sm:$0xff]
  %v296 = vld [vmem:[%s1 + $0xe8] sm:$0xff]
  %v297 = vld [vmem:[%s1 + $0xf0] sm:$0xff]
  %v298 = vld [vmem:[%s1 + $0xf8] sm:$0xff]
  %v299 = vld [vmem:[%s1 + $0x100] sm:$0xff]
  %v300 = vld [vmem:[%s1 + $0x108] sm:$0xff]
  %v301 = vld [vmem:[%s1 + $0x110] sm:$0xff]
  %v302 = vld [vmem:[%s1 + $0x118] sm:$0xff]
  %v303 = vld [vmem:[%s1 + $0x120] sm:$0xff]
  %v304 = vld [vmem:[%s1 + $0x128] sm:$0xff]
  %v305 = vld [vmem:[%s1 + $0x130] sm:$0xff]
  %v306 = vld [vmem:[%s1 + $0x138] sm:$0xff]
  %v307 = vld [vmem:[%s1 + $0x140] sm:$0xff]
  %v308 = vld [vmem:[%s1 + $0x148] sm:$0xff]
  %v309 = vld [vmem:[%s1 + $0x150] sm:$0xff]
  %v310 = vld [vmem:[%s1 + $0x158] sm:$0xff]
  %v311 = vld [vmem:[%s1 + $0x160] sm:$0xff]
  %v312 = vld [vmem:[%s1 + $0x168] sm:$0xff]
  %v313 = vld [vmem:[%s1 + $0x170] sm:$0xff]
  %v314 = vld [vmem:[%s1 + $0x178] sm:$0xff]
  %v315 = vld [vmem:[%s3] sm:$0x7]
  %v317 = vlaneseq
  %v318 = vshrl.u32 %v317, 7
  %v319 = vsub.s32 0, %v318
  %v320 = vrot.slane %v315, %v319
  %v321 = vlaneseq
  %v322 = vshrl.u32 %v321, 7
  %v323 = vsub.s32 1, %v322
  %v324 = vrot.slane %v315, %v323
  %v325 = vlaneseq
  %v326 = vshrl.u32 %v325, 7
  %v327 = vsub.s32 2, %v326
  %v328 = vrot.slane %v315, %v327
  %332 = vmatprep.subr.mxu0 %v268
  %333 = vmatpush1.msra.mxu0 %v267
  %334 = vmatprep.subr.mxu0 %v271
  %335 = vmatpush1.msra.mxu0 %v270
  %336 = vmatprep.subr.mxu0 %v274
  %337 = vmatpush1.msra.mxu0 %v273
  %338 = vmatprep.subr.mxu0 %v277
  %339 = vmatpush1.msra.mxu0 %v276
  %340 = vmatprep.subr.mxu0 %v280
  %341 = vmatpush1.msra.mxu0 %v279
  %342 = vmatprep.subr.mxu0 %v283
  %343 = vmatpush1.msra.mxu0 %v282
  %344 = vmatprep.subr.mxu0 %v286
  %345 = vmatpush1.msra.mxu0 %v285
  %346 = vmatprep.subr.mxu0 %v289
  %347 = vmatpush1.msra.mxu0 %v288
  %348 = vmatprep.subr.mxu0 %v292
  %349 = vmatpush1.msra.mxu0 %v291
  %350 = vmatprep.subr.mxu0 %v295
  %351 = vmatpush1.msra.mxu0 %v294
  %352 = vmatprep.subr.mxu0 %v298
  %353 = vmatpush1.msra.mxu0 %v297
  %354 = vmatprep.subr.mxu0 %v301
  %355 = vmatpush1.msra.mxu0 %v300
  %356 = vmatprep.subr.mxu0 %v304
  %357 = vmatpush1.msra.mxu0 %v303
  %358 = vmatprep.subr.mxu0 %v307
  %359 = vmatpush1.msra.mxu0 %v306
  %360 = vmatprep.subr.mxu0 %v310
  %361 = vmatpush1.msra.mxu0 %v309
  %362 = vmatprep.subr.mxu0 %v313
  %363 = vmatpush1.msra.mxu0 %v312
  %364 = vmatprep.subr.mxu0 0.0
  %365 = vmatpush1.msra.mxu0 0.0
  %366 = vmatprep.subr.mxu0 0.0
  %367 = vmatpush1.msra.mxu0 0.0
  %368 = vmatprep.subr.mxu0 0.0
  %369 = vmatpush1.msra.mxu0 0.0
  %370 = vmatprep.subr.mxu0 0.0
  %371 = vmatpush1.msra.mxu0 0.0
  %372 = vmatprep.subr.mxu0 0.0
  %373 = vmatpush1.msra.mxu0 0.0
  %374 = vmatprep.subr.mxu0 0.0
  %375 = vmatpush1.msra.mxu0 0.0
  %376 = vmatprep.subr.mxu0 0.0
  %377 = vmatpush1.msra.mxu0 0.0
  %378 = vmatprep.subr.mxu0 0.0
  %379 = vmatpush1.msra.mxu0 0.0
  %380 = vmatprep.subr.mxu0 0.0
  %381 = vmatpush1.msra.mxu0 0.0
  %382 = vmatprep.subr.mxu0 0.0
  %383 = vmatpush1.msra.mxu0 0.0
  %384 = vmatprep.subr.mxu0 0.0
  %385 = vmatpush1.msra.mxu0 0.0
  %386 = vmatprep.subr.mxu0 0.0
  %387 = vmatpush1.msra.mxu0 0.0
  %388 = vmatprep.subr.mxu0 0.0
  %389 = vmatpush1.msra.mxu0 0.0
  %390 = vmatprep.subr.mxu0 0.0
  %391 = vmatpush1.msra.mxu0 0.0
  %392 = vmatprep.subr.mxu0 0.0
  %393 = vmatpush1.msra.mxu0 0.0
  %394 = vmatprep.subr.mxu0 0.0
  %395 = vmatpush1.msra.mxu0 0.0
  %396 = vmatprep.mubr.f32.mxu0 0.0
  %397 = vmatmul.mubr.f32.gmra.mrb[0].mxu0 %v259
  %v398 = vpop.f32.mrb[0].mxu0
  %v399 = vadd.f32 %v320, %v398
  %v400 = vpop.f32.mrb[0].mxu0
  %v401 = vadd.f32 %v324, %v400
  %402 = vmatprep.mubr.f32.mxu0 0.0
  %403 = vmatmul.mubr.f32.gmra.mrb[0].mxu0 %v260
  %v404 = vpop.f32.mrb[0].mxu0
  %v405 = vadd.f32 %v320, %v404
  %v406 = vpop.f32.mrb[0].mxu0
  %v407 = vadd.f32 %v324, %v406
  %408 = vmatprep.mubr.f32.mxu0 0.0
  %409 = vmatmul.mubr.f32.gmra.mrb[0].mxu0 %v261
  %v410 = vpop.f32.mrb[0].mxu0
  %v411 = vadd.f32 %v320, %v410
  %v412 = vpop.f32.mrb[0].mxu0
  %v413 = vadd.f32 %v324, %v412
  %414 = vmatprep.mubr.f32.mxu0 0.0
  %415 = vmatmul.mubr.f32.gmra.mrb[0].mxu0 %v262
  %v416 = vpop.f32.mrb[0].mxu0
  %v417 = vadd.f32 %v320, %v416
  %v418 = vpop.f32.mrb[0].mxu0
  %v419 = vadd.f32 %v324, %v418
  %420 = vmatprep.mubr.f32.mxu0 0.0
  %421 = vmatmul.mubr.f32.gmra.mrb[0].mxu0 %v263
  %v422 = vpop.f32.mrb[0].mxu0
  %v423 = vadd.f32 %v320, %v422
  %v424 = vpop.f32.mrb[0].mxu0
  %v425 = vadd.f32 %v324, %v424
  %426 = vmatprep.mubr.f32.mxu0 0.0
  %427 = vmatmul.mubr.f32.gmra.mrb[0].mxu0 %v264
  %v428 = vpop.f32.mrb[0].mxu0
  %v429 = vadd.f32 %v320, %v428
  %v430 = vpop.f32.mrb[0].mxu0
  %v431 = vadd.f32 %v324, %v430
  %432 = vmatprep.mubr.f32.mxu0 0.0
  %433 = vmatmul.mubr.f32.gmra.mrb[0].mxu0 %v265
  %v434 = vpop.f32.mrb[0].mxu0
  %v435 = vadd.f32 %v320, %v434
  %v436 = vpop.f32.mrb[0].mxu0
  %v437 = vadd.f32 %v324, %v436
  %438 = vmatprep.mubr.f32.mxu0 0.0
  %439 = vmatmul.mubr.f32.gmra.mrb[0].mxu0 %v266
  %v440 = vpop.f32.mrb[0].mxu0
  %v441 = vadd.f32 %v320, %v440
  %v442 = vpop.f32.mrb[0].mxu0
  %v443 = vadd.f32 %v324, %v442
  %444 = vdwg.mxu0
  %445 = vmatprep.subr.mxu0 0.0
  %446 = vmatpush1.msra.mxu0 %v269
  %447 = vmatprep.subr.mxu0 0.0
  %448 = vmatpush1.msra.mxu0 %v272
  %449 = vmatprep.subr.mxu0 0.0
  %450 = vmatpush1.msra.mxu0 %v275
  %451 = vmatprep.subr.mxu0 0.0
  %452 = vmatpush1.msra.mxu0 %v278
  %453 = vmatprep.subr.mxu0 0.0
  %454 = vmatpush1.msra.mxu0 %v281
  %455 = vmatprep.subr.mxu0 0.0
  %456 = vmatpush1.msra.mxu0 %v284
  %457 = vmatprep.subr.mxu0 0.0
  %458 = vmatpush1.msra.mxu0 %v287
  %459 = vmatprep.subr.mxu0 0.0
  %460 = vmatpush1.msra.mxu0 %v290
  %461 = vmatprep.subr.mxu0 0.0
  %462 = vmatpush1.msra.mxu0 %v293
  %463 = vmatprep.subr.mxu0 0.0
  %464 = vmatpush1.msra.mxu0 %v296
  %465 = vmatprep.subr.mxu0 0.0
  %466 = vmatpush1.msra.mxu0 %v299
  %467 = vmatprep.subr.mxu0 0.0
  %468 = vmatpush1.msra.mxu0 %v302
  %469 = vmatprep.subr.mxu0 0.0
  %470 = vmatpush1.msra.mxu0 %v305
  %471 = vmatprep.subr.mxu0 0.0
  %472 = vmatpush1.msra.mxu0 %v308
  %473 = vmatprep.subr.mxu0 0.0
  %474 = vmatpush1.msra.mxu0 %v311
  %475 = vmatprep.subr.mxu0 0.0
  %476 = vmatpush1.msra.mxu0 %v314
  %477 = vmatprep.subr.mxu0 0.0
  %478 = vmatpush1.msra.mxu0 0.0
  %479 = vmatprep.subr.mxu0 0.0
  %480 = vmatpush1.msra.mxu0 0.0
  %481 = vmatprep.subr.mxu0 0.0
  %482 = vmatpush1.msra.mxu0 0.0
  %483 = vmatprep.subr.mxu0 0.0
  %484 = vmatpush1.msra.mxu0 0.0
  %485 = vmatprep.subr.mxu0 0.0
  %486 = vmatpush1.msra.mxu0 0.0
  %487 = vmatprep.subr.mxu0 0.0
  %488 = vmatpush1.msra.mxu0 0.0
  %489 = vmatprep.subr.mxu0 0.0
  %490 = vmatpush1.msra.mxu0 0.0
  %491 = vmatprep.subr.mxu0 0.0
  %492 = vmatpush1.msra.mxu0 0.0
  %493 = vmatprep.subr.mxu0 0.0
  %494 = vmatpush1.msra.mxu0 0.0
  %495 = vmatprep.subr.mxu0 0.0
  %496 = vmatpush1.msra.mxu0 0.0
  %497 = vmatprep.subr.mxu0 0.0
  %498 = vmatpush1.msra.mxu0 0.0
  %499 = vmatprep.subr.mxu0 0.0
  %500 = vmatpush1.msra.mxu0 0.0
  %501 = vmatprep.subr.mxu0 0.0
  %502 = vmatpush1.msra.mxu0 0.0
  %503 = vmatprep.subr.mxu0 0.0
  %504 = vmatpush1.msra.mxu0 0.0
  %505 = vmatprep.subr.mxu0 0.0
  %506 = vmatpush1.msra.mxu0 0.0
  %507 = vmatprep.subr.mxu0 0.0
  %508 = vmatpush1.msra.mxu0 0.0
  %509 = vmatprep.mubr.f32.mxu0 0.0
  %510 = vmatmul.mubr.f32.gmra.mrb[0].mxu0 %v259
  %v511 = vpop.f32.mrb[0].mxu0
  %v512 = vadd.f32 %v328, %v511
  %v513 = vpop.f32.mrb[0].mxu0
  %514 = vmatprep.mubr.f32.mxu0 0.0
  %515 = vmatmul.mubr.f32.gmra.mrb[0].mxu0 %v260
  %v516 = vpop.f32.mrb[0].mxu0
  %v517 = vadd.f32 %v328, %v516
  %v518 = vpop.f32.mrb[0].mxu0
  %519 = vmatprep.mubr.f32.mxu0 0.0
  %520 = vmatmul.mubr.f32.gmra.mrb[0].mxu0 %v261
  %v521 = vpop.f32.mrb[0].mxu0
  %v522 = vadd.f32 %v328, %v521
  %v523 = vpop.f32.mrb[0].mxu0
  %524 = vmatprep.mubr.f32.mxu0 0.0
  %525 = vmatmul.mubr.f32.gmra.mrb[0].mxu0 %v262
  %v526 = vpop.f32.mrb[0].mxu0
  %v527 = vadd.f32 %v328, %v526
  %v528 = vpop.f32.mrb[0].mxu0
  %529 = vmatprep.mubr.f32.mxu0 0.0
  %530 = vmatmul.mubr.f32.gmra.mrb[0].mxu0 %v263
  %v531 = vpop.f32.mrb[0].mxu0
  %v532 = vadd.f32 %v328, %v531
  %v533 = vpop.f32.mrb[0].mxu0
  %534 = vmatprep.mubr.f32.mxu0 0.0
  %535 = vmatmul.mubr.f32.gmra.mrb[0].mxu0 %v264
  %v536 = vpop.f32.mrb[0].mxu0
  %v537 = vadd.f32 %v328, %v536
  %v538 = vpop.f32.mrb[0].mxu0
  %539 = vmatprep.mubr.f32.mxu0 0.0
  %540 = vmatmul.mubr.f32.gmra.mrb[0].mxu0 %v265
  %v541 = vpop.f32.mrb[0].mxu0
  %v542 = vadd.f32 %v328, %v541
  %v543 = vpop.f32.mrb[0].mxu0
  %544 = vmatprep.mubr.f32.mxu0 0.0
  %545 = vmatmul.mubr.f32.gmra.mrb[0].mxu0 %v266
  %v546 = vpop.f32.mrb[0].mxu0
  %v547 = vadd.f32 %v328, %v546
  %v548 = vpop.f32.mrb[0].mxu0
  %549 = vdwg.mxu0
  %550 = vst [vmem:[#allocation2] sm:$0xff] %v399
  %551 = vst [vmem:[#allocation2 + $0x8] sm:$0xff] %v401
  %552 = vst [vmem:[#allocation2 + $0x10] sm:$0xff] %v512
  %553 = vst [vmem:[#allocation2 + $0x18] sm:$0xff] %v405
  %554 = vst [vmem:[#allocation2 + $0x20] sm:$0xff] %v407
  %555 = vst [vmem:[#allocation2 + $0x28] sm:$0xff] %v517
  %556 = vst [vmem:[#allocation2 + $0x30] sm:$0xff] %v411
  %557 = vst [vmem:[#allocation2 + $0x38] sm:$0xff] %v413
  %558 = vst [vmem:[#allocation2 + $0x40] sm:$0xff] %v522
  %559 = vst [vmem:[#allocation2 + $0x48] sm:$0xff] %v417
  %560 = vst [vmem:[#allocation2 + $0x50] sm:$0xff] %v419
  %561 = vst [vmem:[#allocation2 + $0x58] sm:$0xff] %v527
  %562 = vst [vmem:[#allocation2 + $0x60] sm:$0xff] %v423
  %563 = vst [vmem:[#allocation2 + $0x68] sm:$0xff] %v425
  %564 = vst [vmem:[#allocation2 + $0x70] sm:$0xff] %v532
  %565 = vst [vmem:[#allocation2 + $0x78] sm:$0xff] %v429
  %566 = vst [vmem:[#allocation2 + $0x80] sm:$0xff] %v431
  %567 = vst [vmem:[#allocation2 + $0x88] sm:$0xff] %v537
  %568 = vst [vmem:[#allocation2 + $0x90] sm:$0xff] %v435
  %569 = vst [vmem:[#allocation2 + $0x98] sm:$0xff] %v437
  %570 = vst [vmem:[#allocation2 + $0xa0] sm:$0xff] %v542
  %571 = vst [vmem:[#allocation2 + $0xa8] sm:$0xff] %v441
  %572 = vst [vmem:[#allocation2 + $0xb0] sm:$0xff] %v443
  %573 = vst [vmem:[#allocation2 + $0xb8] sm:$0xff] %v547
  loop: start=0, step=1, limit=8
  $region29: #{encoder_forward.1} parent=0 // loop_pre_header
    _
  $region30: #{encoder_forward.1} parent=0 // loop_header
    %s575 = sphi 0, %s579
    %p576 = scmp.ge.s32.totalorder %s575, 8
    %v580 = vphi 0.0, %v809
  $region31: #{encoder_forward.1} parent=0 // loop_header_branch
    %578 = sbr.rel (%p576) target = $region35
  $region32: #{encoder_forward.1} parent=0 // loop_body
    %s581 = smul.u32 %s575, 8
    %s582 = sshra.s32 %s581, 3
    %s583 = sand.u32 %s581, 7
    %s584 = smul.u32 %s582, 3
    %s585 = smul.addr %s584, 8
    %s586 = scalar_lea.vmem [#allocation2], %s585
    %v587 = vld [vmem:[%s586] sm:$0xff]
    %v588 = vld [vmem:[%s586 + $0x8] sm:$0xff]
    %v589 = vld [vmem:[%s586 + $0x10] sm:$0xff]
    %s590 = scalar_lea.vmem %s2, 384
    %v591 = vld [vmem:[%s590] sm:$0xff]
    %v592 = vld [vmem:[%s590 + $0x8] sm:$0xff]
    %v593 = vld [vmem:[%s590 + $0x10] sm:$0xff]
    %v594 = vld [vmem:[%s590 + $0x18] sm:$0xff]
    %v595 = vld [vmem:[%s590 + $0x20] sm:$0xff]
    %v596 = vld [vmem:[%s590 + $0x28] sm:$0xff]
    %v597 = vld [vmem:[%s590 + $0x30] sm:$0xff]
    %v598 = vld [vmem:[%s590 + $0x38] sm:$0xff]
    %v599 = vld [vmem:[%s590 + $0x40] sm:$0xff]
    %v600 = vld [vmem:[%s590 + $0x48] sm:$0xff]
    %v601 = vld [vmem:[%s590 + $0x50] sm:$0xff]
    %v602 = vld [vmem:[%s590 + $0x58] sm:$0xff]
    %v603 = vld [vmem:[%s590 + $0x60] sm:$0xff]
    %v604 = vld [vmem:[%s590 + $0x68] sm:$0xff]
    %v605 = vld [vmem:[%s590 + $0x70] sm:$0xff]
    %v606 = vld [vmem:[%s590 + $0x78] sm:$0xff]
    %v607 = vld [vmem:[%s590 + $0x80] sm:$0xff]
    %v608 = vld [vmem:[%s590 + $0x88] sm:$0xff]
    %v609 = vld [vmem:[%s590 + $0x90] sm:$0xff]
    %v610 = vld [vmem:[%s590 + $0x98] sm:$0xff]
    %v611 = vld [vmem:[%s590 + $0xa0] sm:$0xff]
    %v612 = vld [vmem:[%s590 + $0xa8] sm:$0xff]
    %v613 = vld [vmem:[%s590 + $0xb0] sm:$0xff]
    %v614 = vld [vmem:[%s590 + $0xb8] sm:$0xff]
    %v615 = vld [vmem:[%s590 + $0xc0] sm:$0xff]
    %v616 = vld [vmem:[%s590 + $0xc8] sm:$0xff]
    %v617 = vld [vmem:[%s590 + $0xd0] sm:$0xff]
    %v618 = vld [vmem:[%s590 + $0xd8] sm:$0xff]
    %v619 = vld [vmem:[%s590 + $0xe0] sm:$0xff]
    %v620 = vld [vmem:[%s590 + $0xe8] sm:$0xff]
    %v621 = vld [vmem:[%s590 + $0xf0] sm:$0xff]
    %v622 = vld [vmem:[%s590 + $0xf8] sm:$0xff]
    %v623 = vld [vmem:[%s590 + $0x100] sm:$0xff]
    %v624 = vld [vmem:[%s590 + $0x108] sm:$0xff]
    %v625 = vld [vmem:[%s590 + $0x110] sm:$0xff]
    %v626 = vld [vmem:[%s590 + $0x118] sm:$0xff]
    %v627 = vld [vmem:[%s590 + $0x120] sm:$0xff]
    %v628 = vld [vmem:[%s590 + $0x128] sm:$0xff]
    %v629 = vld [vmem:[%s590 + $0x130] sm:$0xff]
    %v630 = vld [vmem:[%s590 + $0x138] sm:$0xff]
    %v631 = vld [vmem:[%s590 + $0x140] sm:$0xff]
    %v632 = vld [vmem:[%s590 + $0x148] sm:$0xff]
    %v633 = vld [vmem:[%s590 + $0x150] sm:$0xff]
    %v634 = vld [vmem:[%s590 + $0x158] sm:$0xff]
    %v635 = vld [vmem:[%s590 + $0x160] sm:$0xff]
    %v636 = vld [vmem:[%s590 + $0x168] sm:$0xff]
    %v637 = vld [vmem:[%s590 + $0x170] sm:$0xff]
    %v638 = vld [vmem:[%s590 + $0x178] sm:$0xff]
    %639 = vmatprep.subr.mxu0 %v592
    %640 = vmatpush1.msra.mxu0 %v591
    %641 = vmatprep.subr.mxu0 %v595
    %642 = vmatpush1.msra.mxu0 %v594
    %643 = vmatprep.subr.mxu0 %v598
    %644 = vmatpush1.msra.mxu0 %v597
    %645 = vmatprep.subr.mxu0 %v601
    %646 = vmatpush1.msra.mxu0 %v600
    %647 = vmatprep.subr.mxu0 %v604
    %648 = vmatpush1.msra.mxu0 %v603
    %649 = vmatprep.subr.mxu0 %v607
    %650 = vmatpush1.msra.mxu0 %v606
    %651 = vmatprep.subr.mxu0 %v610
    %652 = vmatpush1.msra.mxu0 %v609
    %653 = vmatprep.subr.mxu0 %v613
    %654 = vmatpush1.msra.mxu0 %v612
    %655 = vmatprep.subr.mxu0 %v616
    %656 = vmatpush1.msra.mxu0 %v615
    %657 = vmatprep.subr.mxu0 %v619
    %658 = vmatpush1.msra.mxu0 %v618
    %659 = vmatprep.subr.mxu0 %v622
    %660 = vmatpush1.msra.mxu0 %v621
    %661 = vmatprep.subr.mxu0 %v625
    %662 = vmatpush1.msra.mxu0 %v624
    %663 = vmatprep.subr.mxu0 %v628
    %664 = vmatpush1.msra.mxu0 %v627
    %665 = vmatprep.subr.mxu0 %v631
    %666 = vmatpush1.msra.mxu0 %v630
    %667 = vmatprep.subr.mxu0 %v634
    %668 = vmatpush1.msra.mxu0 %v633
    %669 = vmatprep.subr.mxu0 %v637
    %670 = vmatpush1.msra.mxu0 %v636
    %671 = vmatprep.subr.mxu0 0.0
    %672 = vmatpush1.msra.mxu0 0.0
    %673 = vmatprep.subr.mxu0 0.0
    %674 = vmatpush1.msra.mxu0 0.0
    %675 = vmatprep.subr.mxu0 0.0
    %676 = vmatpush1.msra.mxu0 0.0
    %677 = vmatprep.subr.mxu0 0.0
    %678 = vmatpush1.msra.mxu0 0.0
    %679 = vmatprep.subr.mxu0 0.0
    %680 = vmatpush1.msra.mxu0 0.0
    %681 = vmatprep.subr.mxu0 0.0
    %682 = vmatpush1.msra.mxu0 0.0
    %683 = vmatprep.subr.mxu0 0.0
    %684 = vmatpush1.msra.mxu0 0.0
    %685 = vmatprep.subr.mxu0 0.0
    %686 = vmatpush1.msra.mxu0 0.0
    %687 = vmatprep.subr.mxu0 0.0
    %688 = vmatpush1.msra.mxu0 0.0
    %689 = vmatprep.subr.mxu0 0.0
    %690 = vmatpush1.msra.mxu0 0.0
    %691 = vmatprep.subr.mxu0 0.0
    %692 = vmatpush1.msra.mxu0 0.0
    %693 = vmatprep.subr.mxu0 0.0
    %694 = vmatpush1.msra.mxu0 0.0
    %695 = vmatprep.subr.mxu0 0.0
    %696 = vmatpush1.msra.mxu0 0.0
    %697 = vmatprep.subr.mxu0 0.0
    %698 = vmatpush1.msra.mxu0 0.0
    %699 = vmatprep.subr.mxu0 0.0
    %700 = vmatpush1.msra.mxu0 0.0
    %701 = vmatprep.subr.mxu0 0.0
    %702 = vmatpush1.msra.mxu0 0.0
    %703 = vmatprep.mubr.f32.mxu0 0.0
    %704 = vmatmul.mubr.f32.gmra.mrb[0].mxu0 %v580
    %v705 = vpop.f32.mrb[0].mxu0
    %v706 = vadd.f32 0.0, %v705
    %v707 = vpop.f32.mrb[0].mxu0
    %v708 = vadd.f32 0.0, %v707
    %709 = vdwg.mxu0
    %710 = vmatprep.subr.mxu0 0.0
    %711 = vmatpush1.msra.mxu0 %v593
    %712 = vmatprep.subr.mxu0 0.0
    %713 = vmatpush1.msra.mxu0 %v596
    %714 = vmatprep.subr.mxu0 0.0
    %715 = vmatpush1.msra.mxu0 %v599
    %716 = vmatprep.subr.mxu0 0.0
    %717 = vmatpush1.msra.mxu0 %v602
    %718 = vmatprep.subr.mxu0 0.0
    %719 = vmatpush1.msra.mxu0 %v605
    %720 = vmatprep.subr.mxu0 0.0
    %721 = vmatpush1.msra.mxu0 %v608
    %722 = vmatprep.subr.mxu0 0.0
    %723 = vmatpush1.msra.mxu0 %v611
    %724 = vmatprep.subr.mxu0 0.0
    %725 = vmatpush1.msra.mxu0 %v614
    %726 = vmatprep.subr.mxu0 0.0
    %727 = vmatpush1.msra.mxu0 %v617
    %728 = vmatprep.subr.mxu0 0.0
    %729 = vmatpush1.msra.mxu0 %v620
    %730 = vmatprep.subr.mxu0 0.0
    %731 = vmatpush1.msra.mxu0 %v623
    %732 = vmatprep.subr.mxu0 0.0
    %733 = vmatpush1.msra.mxu0 %v626
    %734 = vmatprep.subr.mxu0 0.0
    %735 = vmatpush1.msra.mxu0 %v629
    %736 = vmatprep.subr.mxu0 0.0
    %737 = vmatpush1.msra.mxu0 %v632
    %738 = vmatprep.subr.mxu0 0.0
    %739 = vmatpush1.msra.mxu0 %v635
    %740 = vmatprep.subr.mxu0 0.0
    %741 = vmatpush1.msra.mxu0 %v638
    %742 = vmatprep.subr.mxu0 0.0
    %743 = vmatpush1.msra.mxu0 0.0
    %744 = vmatprep.subr.mxu0 0.0
    %745 = vmatpush1.msra.mxu0 0.0
    %746 = vmatprep.subr.mxu0 0.0
    %747 = vmatpush1.msra.mxu0 0.0
    %748 = vmatprep.subr.mxu0 0.0
    %749 = vmatpush1.msra.mxu0 0.0
    %750 = vmatprep.subr.mxu0 0.0
    %751 = vmatpush1.msra.mxu0 0.0
    %752 = vmatprep.subr.mxu0 0.0
    %753 = vmatpush1.msra.mxu0 0.0
    %754 = vmatprep.subr.mxu0 0.0
    %755 = vmatpush1.msra.mxu0 0.0
    %756 = vmatprep.subr.mxu0 0.0
    %757 = vmatpush1.msra.mxu0 0.0
    %758 = vmatprep.subr.mxu0 0.0
    %759 = vmatpush1.msra.mxu0 0.0
    %760 = vmatprep.subr.mxu0 0.0
    %761 = vmatpush1.msra.mxu0 0.0
    %762 = vmatprep.subr.mxu0 0.0
    %763 = vmatpush1.msra.mxu0 0.0
    %764 = vmatprep.subr.mxu0 0.0
    %765 = vmatpush1.msra.mxu0 0.0
    %766 = vmatprep.subr.mxu0 0.0
    %767 = vmatpush1.msra.mxu0 0.0
    %768 = vmatprep.subr.mxu0 0.0
    %769 = vmatpush1.msra.mxu0 0.0
    %770 = vmatprep.subr.mxu0 0.0
    %771 = vmatpush1.msra.mxu0 0.0
    %772 = vmatprep.subr.mxu0 0.0
    %773 = vmatpush1.msra.mxu0 0.0
    %774 = vmatprep.mubr.f32.mxu0 0.0
    %775 = vmatmul.mubr.f32.gmra.mrb[0].mxu0 %v580
    %v776 = vpop.f32.mrb[0].mxu0
    %v777 = vadd.f32 0.0, %v776
    %v778 = vpop.f32.mrb[0].mxu0
    %779 = vdwg.mxu0
    %s780 = scalar_lea.vmem %s4, 1
    %v781 = vld [vmem:[%s780] sm:$0x1]
    %v783 = vlaneseq
    %v784 = vshrl.u32 %v783, 7
    %v785 = vsub.s32 0, %v784
    %v786 = vrot.slane %v781, %v785
    %v788 = vadd.f32 %v777, %v786
    %v789 = vadd.f32 %v587, %v706
    %v790 = vxor.u32 %v789, 2147483648
    %v791 = vmul.f32 %v790, 1.442695
    %v792 = vpow.pop %v791
    %v793 = vadd.f32 %v792, 1.0
    %v794 = vrcp.pop %v793
    %v795 = vmul.f32 1.0, %v794
    %v796 = vadd.f32 %v588, %v708
    %v797 = vxor.u32 %v796, 2147483648
    %v798 = vmul.f32 %v797, 1.442695
    %v799 = vpow.pop %v798
    %v800 = vadd.f32 %v799, 1.0
    %v801 = vrcp.pop %v800
    %v802 = vmul.f32 1.0, %v801
    %v803 = vmul.f32 %v795, %v788
    %v804 = vadd.f32 %v589, %v803
    %v805 = vtanh.pop %v804
    %v806 = vsub.f32 1.0, %v802
    %v807 = vmul.f32 %v806, %v805
    %v808 = vmul.f32 %v802, %v580
    %v809 = vadd.f32 %v807, %v808
    %s810 = scalar_lea.vmem %s5, %s581
    %811 = vst [vmem:[%s810] sm:$0xff] %v809
  $region33: #{encoder_forward.1} parent=0 // loop_footer
    %s579 = sadd.s32 1, %s575
  $region34: #{encoder_forward.1} parent=0 // loop_footer_branch
    %574 = sbr.rel target = $region30
  $region35: #{encoder_forward.1} parent=0 // loop_exit
    _
  %s812 = scalar_lea.vmem %s6, 8
  %813 = vst [vmem:[%s812] sm:$0xff] %v580
  // Predicated region
  $region36: #{encoder_forward.1} parent=0 // pred_check
    _
  $region37: #{encoder_forward.1} parent=0 // pred_check_branch
    %815 = sbr.rel (0) target = $region39
  $region38: #{encoder_forward.1} parent=0 // pred_region
    _
  $region39: #{encoder_forward.1} parent=0 // pred_fallthru
    _
  // Predicated region
  $region40: #{encoder_forward.1} parent=0 // pred_check
    _
  $region41: #{encoder_forward.1} parent=0 // pred_check_branch
    %817 = sbr.rel (0) target = $region43
  $region42: #{encoder_forward.1} parent=0 // pred_region
    _
  $region43: #{encoder_forward.1} parent=0 // pred_fallthru
    _
  // Predicated region
  $region44: #{encoder_forward.1} parent=0 // pred_check
    _
  $region45: #{encoder_forward.1} parent=0 // pred_check_branch
    %819 = sbr.rel (0) target = $region47
  $region46: #{encoder_forward.1} parent=0 // pred_region
    _
  $region47: #{encoder_forward.1} parent=0 // pred_fallthru
    _
  // Predicated region
  $region48: #{encoder_forward.1} parent=0 // pred_check
    _
  $region49: #{encoder_forward.1} parent=0 // pred_check_branch
    %821 = sbr.rel (0) target = $region51
  $region50: #{encoder_forward.1} parent=0 // pred_region
    _
  $region51: #{encoder_forward.1} parent=0 // pred_fallthru
    _

</llo_original>
